<compile_context>
chip_gen: v5e
topology: v5e:2x2
jax: 0.10.0
libtpu: 0.0.40
codegen_flags: <defaults>
</compile_context>

<pallas_src>
import functools

import jax
import jax.numpy as jnp
from jax.experimental import pallas as pl
from jax.experimental.pallas import tpu as pltpu

BN_EPS = 1e-5
_LANE = 128
_SUBLANE = 8


def _round_up(v, m):
    return (v + m - 1) // m * m


def _compute_lanes(n_features, encoder_neurons, decoder_neurons, latent_dim):
    widest = max([n_features, latent_dim, *encoder_neurons, *decoder_neurons])
    # Room for the packed output layout: recon at [0,F), z_mean at [F,F+L),
    # z_log at [lanes/2+F, lanes/2+F+L)  ->  need lanes >= 2*(F+L).
    need = max(widest, 2 * (n_features + latent_dim))
    return _round_up(need, _LANE)


# ---------------------------------------------------------------------------
# Kernel
# ---------------------------------------------------------------------------
def vae_forward_kernel(n_enc, n_dec, n_features, latent_dim,
                       xe_ref, w_ref, b_ref, out_ref, xin_ref):
    """Whole VAE forward for one batch tile.

    xe_ref : (TB, F+L) bf16 -- x in cols [0,F), reparam eps in cols [F,F+L)
    w_ref  : (n_layers, LANES, LANES) bf16, zero-padded, BN-folded weights
             layer order: enc0..enc{E-1}, z_mean, z_log, dec0..dec{D-1}
    b_ref  : (n_layers, LANES) f32 biases (same order)
    out_ref: (TB, LANES) bf16 -- recon in [0,F), z_mean in [F,F+L),
             z_log in [LANES/2+F, LANES/2+F+L)
    xin_ref: (TB, LANES) f32 VMEM scratch for the lane-padded input slab
    """
    half = out_ref.shape[-1] // 2
    fl = n_features + latent_dim

    # Lane-pad the packed (x|eps) block into a zeroed f32 slab in VMEM.
    # Padding lanes MUST be exactly zero (finite) so they can never poison
    # the f32 MXU accumulation (NaN/inf * 0-weight would be NaN).
    xin_ref[...] = jnp.zeros_like(xin_ref)
    xin_ref[:, :fl] = xe_ref[...].astype(jnp.float32)
    xin = xin_ref[...]

    def dense(h, i):
        w = w_ref[i]                                           # (LANES, LANES) bf16
        acc = jnp.dot(h.astype(w.dtype), w,
                      preferred_element_type=jnp.float32)      # MXU, f32 accum
        return acc + b_ref[i:i + 1, :]                         # f32

    # ----- encoder (eval BatchNorm folded into w/b; Dropout = identity) -----
    h = xin
    for i in range(n_enc):
        h = jnp.maximum(dense(h, i), 0.0)

    # ----- latent heads -----
    # zm: z_mean at cols [F, F+L), zero elsewhere.
    # zl: z_log at cols [F, F+L) AND a duplicate copy at [half+F, half+F+L)
    #     (the duplicate lands directly in the packed output), zero elsewhere.
    zm = dense(h, n_enc)
    zl = dense(h, n_enc + 1)

    # Reparameterisation: eps sits at cols [F, F+L) of xin, already aligned
    # with z_mean/z_log, so no lane shuffling is required.  Outside the latent
    # cols zl == 0 -> exp(0) = 1 and xin is x (killed by the zero rows of the
    # dec0 weight) or 0, so nothing leaks downstream.
    z = zm + jnp.exp(0.5 * zl) * xin

    # ----- decoder (BN folded; every decoder layer ends in ReLU) -----
    h = z
    for i in range(n_enc + 2, n_enc + 2 + n_dec):
        h = jnp.maximum(dense(h, i), 0.0)

    # Pack recon | z_mean | z_log into one lane-dense output slab:
    # h occupies cols [0,F), zm cols [F,F+L); the upper-half copy of zl
    # carries z_log (mask out its lower-half copy).
    col = jax.lax.broadcasted_iota(jnp.int32, zl.shape, dimension=1)
    out = h + zm + jnp.where(col >= half, zl, 0.0)
    out_ref[...] = out.astype(out_ref.dtype)


# ---------------------------------------------------------------------------
# Parameters: torch-like init, then one-time fold/pad/pack transform
# ---------------------------------------------------------------------------
def init_params(key, n_features, encoder_neurons, decoder_neurons, latent_dim):
    """Raw parameters in the same structure as the torch module (f32)."""
    enc_dims = [n_features, *encoder_neurons]
    dec_dims = [latent_dim, *decoder_neurons, n_features]

    def linear(k, fan_in, fan_out):
        kw, kb = jax.random.split(k)
        bound = float(fan_in) ** -0.5
        w = jax.random.uniform(kw, (fan_in, fan_out), jnp.float32, -bound, bound)
        b = jax.random.uniform(kb, (fan_out,), jnp.float32, -bound, bound)
        return w, b

    def bn_params(k, dim):
        k1, k2, k3, k4 = jax.random.split(k, 4)
        gamma = 1.0 + 0.1 * jax.random.normal(k1, (dim,), jnp.float32)
        beta = 0.1 * jax.random.normal(k2, (dim,), jnp.float32)
        mean = 0.1 * jax.random.normal(k3, (dim,), jnp.float32)
        var = 1.0 + 0.1 * jax.random.uniform(k4, (dim,), jnp.float32)
        return gamma, beta, mean, var

    keys = iter(jax.random.split(key, 64))
    encoder = []
    for i in range(len(enc_dims) - 1):
        w, b = linear(next(keys), enc_dims[i], enc_dims[i + 1])
        encoder.append((w, b, bn_params(next(keys), enc_dims[i + 1])))

    z_mean = linear(next(keys), enc_dims[-1], latent_dim)
    z_log = linear(next(keys), enc_dims[-1], latent_dim)

    decoder = []
    n_dec = len(dec_dims) - 1
    for i in range(n_dec):
        w, b = linear(next(keys), dec_dims[i], dec_dims[i + 1])
        bn = bn_params(next(keys), dec_dims[i + 1]) if i < n_dec - 1 else None
        decoder.append((w, b, bn))

    return {"encoder": encoder, "z_mean": z_mean, "z_log": z_log,
            "decoder": decoder}


def _fold_bn(w, b, bn):
    """Fold eval-mode BatchNorm1d into the preceding Linear."""
    if bn is None:
        return w, b
    gamma, beta, mean, var = bn
    scale = gamma * jax.lax.rsqrt(var + BN_EPS)
    return w * scale[None, :], (b - mean) * scale + beta


def prepare_params(raw, n_features, latent_dim, lanes,
                   compute_dtype=jnp.bfloat16):
    """One-time transform: fold BN, pad & pack all layers into two slabs.

    INVARIANT: everything outside each layer's active row/col window stays
    exactly zero -- the kernel relies on this to keep junk lanes finite and
    out of the latent / output columns.
    """
    f, l = n_features, latent_dim
    half = lanes // 2
    assert f + l <= half, "output layout requires lanes >= 2*(n_features+latent_dim)"
    w_list, b_list = [], []

    def add(w, b, row_off=0, col_off=0):
        wp = jnp.zeros((lanes, lanes), jnp.float32)
        wp = wp.at[row_off:row_off + w.shape[0],
                   col_off:col_off + w.shape[1]].set(w)
        bp = jnp.zeros((lanes,), jnp.float32)
        bp = bp.at[col_off:col_off + b.shape[0]].set(b)
        w_list.append(wp)
        b_list.append(bp)

    # encoder (BN folded), natural row/col placement.  Rows [f, lanes) stay
    # zero, so the eps lanes packed next to x never reach the encoder.
    for w, b, bn in raw["encoder"]:
        add(*_fold_bn(w, b, bn))

    # z_mean head -> cols [f, f+l)
    zmw, zmb = raw["z_mean"]
    add(zmw, zmb, col_off=f)

    # z_log head -> cols [f, f+l) (aligned with z_mean/eps for the reparam)
    # plus a duplicated copy at cols [half+f, half+f+l) for the packed output.
    zlw, zlb = raw["z_log"]
    wp = jnp.zeros((lanes, lanes), jnp.float32)
    wp = wp.at[:zlw.shape[0], f:f + l].set(zlw)
    wp = wp.at[:zlw.shape[0], half + f:half + f + l].set(zlw)
    bp = jnp.zeros((lanes,), jnp.float32)
    bp = bp.at[f:f + l].set(zlb)
    bp = bp.at[half + f:half + f + l].set(zlb)
    w_list.append(wp)
    b_list.append(bp)

    # decoder: layer 0 reads z from cols [f, f+l) -> rows offset by f; its
    # rows [0, f) stay zero so the x lanes inside z contribute nothing.
    dec = raw["decoder"]
    w0, b0, bn0 = dec[0]
    add(*_fold_bn(w0, b0, bn0), row_off=f)
    for w, b, bn in dec[1:]:
        add(*_fold_bn(w, b, bn))

    # TODO(synk): if tighter accuracy is ever needed, keep the folded scales of
    # the first/last layers in f32 instead of casting the whole slab to bf16.
    w_slab = jnp.stack(w_list).astype(compute_dtype)   # (n_layers, lanes, lanes)
    b_slab = jnp.stack(b_list).astype(jnp.float32)     # (n_layers, lanes)
    return w_slab, b_slab


# ---------------------------------------------------------------------------
# Forward wrapper
# ---------------------------------------------------------------------------
@functools.partial(
    jax.jit,
    static_argnames=("n_features", "latent_dim", "n_encoder_layers",
                     "block_batch"))
def inner_autoencoder_forward(x, eps, w_slab, b_slab, *, n_features,
                              latent_dim, n_encoder_layers, block_batch=2048):
    batch = x.shape[0]
    n_layers, lanes, _ = w_slab.shape
    f, l = n_features, latent_dim
    fl = f + l
    half = lanes // 2
    n_enc = n_encoder_layers
    n_dec = n_layers - n_enc - 2   # two latent-head layers in the slab

    # Pad batch only to the sublane multiple; a ragged last tile is handled by
    # Pallas (masked writeback).  Aim for >= 2 tiles so ("parallel",) can use
    # both TensorCores on v7x; cap the tile so the double-buffered VMEM
    # footprint (~1.6 KiB per row) stays far below the 32 MiB scoped default.
    b_pad = _round_up(batch, _SUBLANE)
    tb = min(block_batch, max(_SUBLANE, _round_up(-(-b_pad // 2), _SUBLANE)))
    num_tiles = -(-b_pad // tb)

    # Single packed, lane-narrow bf16 input stream: x | eps (F+L lanes).
    xe = jnp.concatenate([x, eps], axis=1).astype(jnp.bfloat16)
    if b_pad != batch:
        xe = jnp.pad(xe, ((0, b_pad - batch), (0, 0)))

    kernel = functools.partial(vae_forward_kernel, n_enc, n_dec, f, l)

    out = pl.pallas_call(
        kernel,
        out_shape=jax.ShapeDtypeStruct((b_pad, lanes), jnp.bfloat16),
        grid_spec=pltpu.PrefetchScalarGridSpec(
            num_scalar_prefetch=0,
            grid=(num_tiles,),
            in_specs=[
                pl.BlockSpec((tb, fl), lambda i: (i, 0)),            # x|eps
                pl.BlockSpec((n_layers, lanes, lanes),
                             lambda i: (0, 0, 0)),                   # weights (resident)
                pl.BlockSpec((n_layers, lanes), lambda i: (0, 0)),   # biases (resident)
            ],
            out_specs=pl.BlockSpec((tb, lanes), lambda i: (i, 0)),
            scratch_shapes=[pltpu.VMEM((tb, lanes), jnp.float32)],
        ),
        compiler_params=pltpu.CompilerParams(
            dimension_semantics=("parallel",)),
    )(xe, w_slab, b_slab)

    recon = out[:batch, :f].astype(jnp.float32)
    z_mean = out[:batch, f:f + l].astype(jnp.float32)
    z_log = out[:batch, half + f:half + f + l].astype(jnp.float32)
    return recon, z_mean, z_log


# ---------------------------------------------------------------------------
# Pure-JAX f32 reference (unfolded BN, separate heads) for validation
# ---------------------------------------------------------------------------
def reference_forward(x, eps, raw):
    def bn_apply(h, bn):
        gamma, beta, mean, var = bn
        return (h - mean) * jax.lax.rsqrt(var + BN_EPS) * gamma + beta

    h = x
    for w, b, bn in raw["encoder"]:
        h = jnp.maximum(bn_apply(h @ w + b, bn), 0.0)
    zmw, zmb = raw["z_mean"]
    zlw, zlb = raw["z_log"]
    z_mean = h @ zmw + zmb
    z_log = h @ zlw + zlb
    h = z_mean + jnp.exp(0.5 * z_log) * eps
    for w, b, bn in raw["decoder"]:
        h = h @ w + b
        if bn is not None:
            h = bn_apply(h, bn)
        h = jnp.maximum(h, 0.0)
    return h, z_mean, z_log


if __name__ == "__main__":
    n_features = 16
    latent_dim = 2
    encoder_neurons = [128, 64, 32]
    decoder_neurons = [32, 64, 128]
    batch = 8

    key = jax.random.PRNGKey(0)
    k_x, k_eps, k_params = jax.random.split(key, 3)

    x = jax.random.normal(k_x, (batch, n_features), jnp.float32)
    eps = jax.random.normal(k_eps, (batch, latent_dim), jnp.float32)

    raw = init_params(k_params, n_features, encoder_neurons, decoder_neurons,
                      latent_dim)
    lanes = _compute_lanes(n_features, encoder_neurons, decoder_neurons,
                           latent_dim)
    w_slab, b_slab = prepare_params(raw, n_features, latent_dim, lanes)

    recon, z_mean, z_log = inner_autoencoder_forward(
        x, eps, w_slab, b_slab,
        n_features=n_features, latent_dim=latent_dim,
        n_encoder_layers=len(encoder_neurons))
    jax.block_until_ready((recon, z_mean, z_log))

    assert recon.shape == (batch, n_features)
    assert z_mean.shape == (batch, latent_dim)
    assert z_log.shape == (batch, latent_dim)
    assert bool(jnp.all(jnp.isfinite(recon)))

    # Validate the fused/folded bf16 kernel against the plain f32 reference;
    # tolerance covers bf16 inputs/weights/outputs across 9 chained layers.
    ref_recon, ref_zm, ref_zl = reference_forward(x, eps, raw)
    assert bool(jnp.allclose(z_mean, ref_zm, rtol=1e-1, atol=1e-1))
    assert bool(jnp.allclose(z_log, ref_zl, rtol=1e-1, atol=1e-1))
    assert bool(jnp.allclose(recon, ref_recon, rtol=1e-1, atol=1e-1))

    print("KERNEL_OK")
</pallas_src>

<mosaic_0001>
module attributes {stable_mosaic.version = 11 : i64} {
  func.func @vae_forward_kernel(%arg0: i32, %arg1: memref<8x18xbf16, #tpu.memory_space<vmem>>, %arg2: memref<9x128x128xbf16, #tpu.memory_space<vmem>>, %arg3: memref<9x128xf32, #tpu.memory_space<vmem>>, %arg4: memref<8x128xbf16, #tpu.memory_space<vmem>>, %arg5: memref<8x128xf32, #tpu.memory_space<vmem>>) attributes {dimension_semantics = [#tpu.dimension_semantics<parallel>], iteration_bounds = array<i64: 1>, scalar_prefetch = 0 : i64, scratch_operands = 1 : i64, tpu.core_type = #tpu.core_type<tc>, window_params = [{transform_indices = @transform_0, window_bounds = array<i64: 8, 18>}, {pipeline_mode = #tpu.pipeline_mode<synchronous>, transform_indices = @transform_1, window_bounds = array<i64: 9, 128, 128>}, {pipeline_mode = #tpu.pipeline_mode<synchronous>, transform_indices = @transform_2, window_bounds = array<i64: 9, 128>}, {transform_indices = @transform_3, window_bounds = array<i64: 8, 128>}]} {
    %cst = arith.constant 0.000000e+00 : f32
    %0 = vector.broadcast %cst : f32 to vector<8x128xf32>
    %c0 = arith.constant 0 : index
    %c0_0 = arith.constant 0 : index
    %1 = vector.load %arg5[%c0, %c0_0] : memref<8x128xf32, #tpu.memory_space<vmem>>, vector<8x128xf32>
    tpu.vector_store %arg5[%c0, %c0_0], %0 {strides = array<i32>} : memref<8x128xf32, #tpu.memory_space<vmem>>, vector<8x128xf32>,
    %c0_1 = arith.constant 0 : index
    %c0_2 = arith.constant 0 : index
    %2 = vector.load %arg1[%c0_1, %c0_2] : memref<8x18xbf16, #tpu.memory_space<vmem>>, vector<8x18xbf16>
    %3 = arith.extf %2 : vector<8x18xbf16> to vector<8x18xf32>
    %c0_3 = arith.constant 0 : index
    %c0_4 = arith.constant 0 : index
    %4 = vector.load %arg5[%c0_3, %c0_4] : memref<8x128xf32, #tpu.memory_space<vmem>>, vector<8x18xf32>
    tpu.vector_store %arg5[%c0_3, %c0_4], %3 {strides = array<i32>} : memref<8x128xf32, #tpu.memory_space<vmem>>, vector<8x18xf32>,
    %c0_5 = arith.constant 0 : index
    %c0_6 = arith.constant 0 : index
    %5 = vector.load %arg5[%c0_5, %c0_6] : memref<8x128xf32, #tpu.memory_space<vmem>>, vector<8x128xf32>
    %c0_7 = arith.constant 0 : index
    %c0_8 = arith.constant 0 : index
    %c0_9 = arith.constant 0 : index
    %6 = vector.load %arg2[%c0_7, %c0_8, %c0_9] : memref<9x128x128xbf16, #tpu.memory_space<vmem>>, vector<1x128x128xbf16>
    %7 = vector.shape_cast %6 : vector<1x128x128xbf16> to vector<128x128xbf16>
    %8 = arith.truncf %5 : vector<8x128xf32> to vector<8x128xbf16>
    %cst_10 = arith.constant dense<0.000000e+00> : vector<8x128xf32>
    %9 = tpu.matmul %8, %7, %cst_10 {dimension_numbers = #tpu.dot_dimension_numbers<[1], [0], [0], [1], [0, 0, 1, 1], [], []>} : vector<8x128xbf16>, vector<128x128xbf16>, vector<8x128xf32> -> vector<8x128xf32>
    %c0_11 = arith.constant 0 : index
    %c0_12 = arith.constant 0 : index
    %10 = vector.load %arg3[%c0_11, %c0_12] : memref<9x128xf32, #tpu.memory_space<vmem>>, vector<1x128xf32>
    %11 = vector.broadcast %10 : vector<1x128xf32> to vector<8x128xf32>
    %12 = arith.addf %9, %11 : vector<8x128xf32>
    %cst_13 = arith.constant 0.000000e+00 : f32
    %13 = vector.broadcast %cst_13 : f32 to vector<8x128xf32>
    %14 = arith.maximumf %12, %13 : vector<8x128xf32>
    %c1 = arith.constant 1 : index
    %c0_14 = arith.constant 0 : index
    %c0_15 = arith.constant 0 : index
    %15 = vector.load %arg2[%c1, %c0_14, %c0_15] : memref<9x128x128xbf16, #tpu.memory_space<vmem>>, vector<1x128x128xbf16>
    %16 = vector.shape_cast %15 : vector<1x128x128xbf16> to vector<128x128xbf16>
    %17 = arith.truncf %14 : vector<8x128xf32> to vector<8x128xbf16>
    %cst_16 = arith.constant dense<0.000000e+00> : vector<8x128xf32>
    %18 = tpu.matmul %17, %16, %cst_16 {dimension_numbers = #tpu.dot_dimension_numbers<[1], [0], [0], [1], [0, 0, 1, 1], [], []>} : vector<8x128xbf16>, vector<128x128xbf16>, vector<8x128xf32> -> vector<8x128xf32>
    %c1_17 = arith.constant 1 : index
    %c0_18 = arith.constant 0 : index
    %19 = vector.load %arg3[%c1_17, %c0_18] : memref<9x128xf32, #tpu.memory_space<vmem>>, vector<1x128xf32>
    %20 = vector.broadcast %19 : vector<1x128xf32> to vector<8x128xf32>
    %21 = arith.addf %18, %20 : vector<8x128xf32>
    %cst_19 = arith.constant 0.000000e+00 : f32
    %22 = vector.broadcast %cst_19 : f32 to vector<8x128xf32>
    %23 = arith.maximumf %21, %22 : vector<8x128xf32>
    %c2 = arith.constant 2 : index
    %c0_20 = arith.constant 0 : index
    %c0_21 = arith.constant 0 : index
    %24 = vector.load %arg2[%c2, %c0_20, %c0_21] : memref<9x128x128xbf16, #tpu.memory_space<vmem>>, vector<1x128x128xbf16>
    %25 = vector.shape_cast %24 : vector<1x128x128xbf16> to vector<128x128xbf16>
    %26 = arith.truncf %23 : vector<8x128xf32> to vector<8x128xbf16>
    %cst_22 = arith.constant dense<0.000000e+00> : vector<8x128xf32>
    %27 = tpu.matmul %26, %25, %cst_22 {dimension_numbers = #tpu.dot_dimension_numbers<[1], [0], [0], [1], [0, 0, 1, 1], [], []>} : vector<8x128xbf16>, vector<128x128xbf16>, vector<8x128xf32> -> vector<8x128xf32>
    %c2_23 = arith.constant 2 : index
    %c0_24 = arith.constant 0 : index
    %28 = vector.load %arg3[%c2_23, %c0_24] : memref<9x128xf32, #tpu.memory_space<vmem>>, vector<1x128xf32>
    %29 = vector.broadcast %28 : vector<1x128xf32> to vector<8x128xf32>
    %30 = arith.addf %27, %29 : vector<8x128xf32>
    %cst_25 = arith.constant 0.000000e+00 : f32
    %31 = vector.broadcast %cst_25 : f32 to vector<8x128xf32>
    %32 = arith.maximumf %30, %31 : vector<8x128xf32>
    %c3 = arith.constant 3 : index
    %c0_26 = arith.constant 0 : index
    %c0_27 = arith.constant 0 : index
    %33 = vector.load %arg2[%c3, %c0_26, %c0_27] : memref<9x128x128xbf16, #tpu.memory_space<vmem>>, vector<1x128x128xbf16>
    %34 = vector.shape_cast %33 : vector<1x128x128xbf16> to vector<128x128xbf16>
    %35 = arith.truncf %32 : vector<8x128xf32> to vector<8x128xbf16>
    %cst_28 = arith.constant dense<0.000000e+00> : vector<8x128xf32>
    %36 = tpu.matmul %35, %34, %cst_28 {dimension_numbers = #tpu.dot_dimension_numbers<[1], [0], [0], [1], [0, 0, 1, 1], [], []>} : vector<8x128xbf16>, vector<128x128xbf16>, vector<8x128xf32> -> vector<8x128xf32>
    %c3_29 = arith.constant 3 : index
    %c0_30 = arith.constant 0 : index
    %37 = vector.load %arg3[%c3_29, %c0_30] : memref<9x128xf32, #tpu.memory_space<vmem>>, vector<1x128xf32>
    %38 = vector.broadcast %37 : vector<1x128xf32> to vector<8x128xf32>
    %39 = arith.addf %36, %38 : vector<8x128xf32>
    %c4 = arith.constant 4 : index
    %c0_31 = arith.constant 0 : index
    %c0_32 = arith.constant 0 : index
    %40 = vector.load %arg2[%c4, %c0_31, %c0_32] : memref<9x128x128xbf16, #tpu.memory_space<vmem>>, vector<1x128x128xbf16>
    %41 = vector.shape_cast %40 : vector<1x128x128xbf16> to vector<128x128xbf16>
    %42 = arith.truncf %32 : vector<8x128xf32> to vector<8x128xbf16>
    %cst_33 = arith.constant dense<0.000000e+00> : vector<8x128xf32>
    %43 = tpu.matmul %42, %41, %cst_33 {dimension_numbers = #tpu.dot_dimension_numbers<[1], [0], [0], [1], [0, 0, 1, 1], [], []>} : vector<8x128xbf16>, vector<128x128xbf16>, vector<8x128xf32> -> vector<8x128xf32>
    %c4_34 = arith.constant 4 : index
    %c0_35 = arith.constant 0 : index
    %44 = vector.load %arg3[%c4_34, %c0_35] : memref<9x128xf32, #tpu.memory_space<vmem>>, vector<1x128xf32>
    %45 = vector.broadcast %44 : vector<1x128xf32> to vector<8x128xf32>
    %46 = arith.addf %43, %45 : vector<8x128xf32>
    %cst_36 = arith.constant 5.000000e-01 : f32
    %47 = vector.broadcast %cst_36 : f32 to vector<8x128xf32>
    %48 = arith.mulf %47, %46 : vector<8x128xf32>
    %49 = math.exp %48 : vector<8x128xf32>
    %50 = arith.mulf %49, %5 : vector<8x128xf32>
    %51 = arith.addf %39, %50 : vector<8x128xf32>
    %c5 = arith.constant 5 : index
    %c0_37 = arith.constant 0 : index
    %c0_38 = arith.constant 0 : index
    %52 = vector.load %arg2[%c5, %c0_37, %c0_38] : memref<9x128x128xbf16, #tpu.memory_space<vmem>>, vector<1x128x128xbf16>
    %53 = vector.shape_cast %52 : vector<1x128x128xbf16> to vector<128x128xbf16>
    %54 = arith.truncf %51 : vector<8x128xf32> to vector<8x128xbf16>
    %cst_39 = arith.constant dense<0.000000e+00> : vector<8x128xf32>
    %55 = tpu.matmul %54, %53, %cst_39 {dimension_numbers = #tpu.dot_dimension_numbers<[1], [0], [0], [1], [0, 0, 1, 1], [], []>} : vector<8x128xbf16>, vector<128x128xbf16>, vector<8x128xf32> -> vector<8x128xf32>
    %c5_40 = arith.constant 5 : index
    %c0_41 = arith.constant 0 : index
    %56 = vector.load %arg3[%c5_40, %c0_41] : memref<9x128xf32, #tpu.memory_space<vmem>>, vector<1x128xf32>
    %57 = vector.broadcast %56 : vector<1x128xf32> to vector<8x128xf32>
    %58 = arith.addf %55, %57 : vector<8x128xf32>
    %cst_42 = arith.constant 0.000000e+00 : f32
    %59 = vector.broadcast %cst_42 : f32 to vector<8x128xf32>
    %60 = arith.maximumf %58, %59 : vector<8x128xf32>
    %c6 = arith.constant 6 : index
    %c0_43 = arith.constant 0 : index
    %c0_44 = arith.constant 0 : index
    %61 = vector.load %arg2[%c6, %c0_43, %c0_44] : memref<9x128x128xbf16, #tpu.memory_space<vmem>>, vector<1x128x128xbf16>
    %62 = vector.shape_cast %61 : vector<1x128x128xbf16> to vector<128x128xbf16>
    %63 = arith.truncf %60 : vector<8x128xf32> to vector<8x128xbf16>
    %cst_45 = arith.constant dense<0.000000e+00> : vector<8x128xf32>
    %64 = tpu.matmul %63, %62, %cst_45 {dimension_numbers = #tpu.dot_dimension_numbers<[1], [0], [0], [1], [0, 0, 1, 1], [], []>} : vector<8x128xbf16>, vector<128x128xbf16>, vector<8x128xf32> -> vector<8x128xf32>
    %c6_46 = arith.constant 6 : index
    %c0_47 = arith.constant 0 : index
    %65 = vector.load %arg3[%c6_46, %c0_47] : memref<9x128xf32, #tpu.memory_space<vmem>>, vector<1x128xf32>
    %66 = vector.broadcast %65 : vector<1x128xf32> to vector<8x128xf32>
    %67 = arith.addf %64, %66 : vector<8x128xf32>
    %cst_48 = arith.constant 0.000000e+00 : f32
    %68 = vector.broadcast %cst_48 : f32 to vector<8x128xf32>
    %69 = arith.maximumf %67, %68 : vector<8x128xf32>
    %c7 = arith.constant 7 : index
    %c0_49 = arith.constant 0 : index
    %c0_50 = arith.constant 0 : index
    %70 = vector.load %arg2[%c7, %c0_49, %c0_50] : memref<9x128x128xbf16, #tpu.memory_space<vmem>>, vector<1x128x128xbf16>
    %71 = vector.shape_cast %70 : vector<1x128x128xbf16> to vector<128x128xbf16>
    %72 = arith.truncf %69 : vector<8x128xf32> to vector<8x128xbf16>
    %cst_51 = arith.constant dense<0.000000e+00> : vector<8x128xf32>
    %73 = tpu.matmul %72, %71, %cst_51 {dimension_numbers = #tpu.dot_dimension_numbers<[1], [0], [0], [1], [0, 0, 1, 1], [], []>} : vector<8x128xbf16>, vector<128x128xbf16>, vector<8x128xf32> -> vector<8x128xf32>
    %c7_52 = arith.constant 7 : index
    %c0_53 = arith.constant 0 : index
    %74 = vector.load %arg3[%c7_52, %c0_53] : memref<9x128xf32, #tpu.memory_space<vmem>>, vector<1x128xf32>
    %75 = vector.broadcast %74 : vector<1x128xf32> to vector<8x128xf32>
    %76 = arith.addf %73, %75 : vector<8x128xf32>
    %cst_54 = arith.constant 0.000000e+00 : f32
    %77 = vector.broadcast %cst_54 : f32 to vector<8x128xf32>
    %78 = arith.maximumf %76, %77 : vector<8x128xf32>
    %c8 = arith.constant 8 : index
    %c0_55 = arith.constant 0 : index
    %c0_56 = arith.constant 0 : index
    %79 = vector.load %arg2[%c8, %c0_55, %c0_56] : memref<9x128x128xbf16, #tpu.memory_space<vmem>>, vector<1x128x128xbf16>
    %80 = vector.shape_cast %79 : vector<1x128x128xbf16> to vector<128x128xbf16>
    %81 = arith.truncf %78 : vector<8x128xf32> to vector<8x128xbf16>
    %cst_57 = arith.constant dense<0.000000e+00> : vector<8x128xf32>
    %82 = tpu.matmul %81, %80, %cst_57 {dimension_numbers = #tpu.dot_dimension_numbers<[1], [0], [0], [1], [0, 0, 1, 1], [], []>} : vector<8x128xbf16>, vector<128x128xbf16>, vector<8x128xf32> -> vector<8x128xf32>
    %c8_58 = arith.constant 8 : index
    %c0_59 = arith.constant 0 : index
    %83 = vector.load %arg3[%c8_58, %c0_59] : memref<9x128xf32, #tpu.memory_space<vmem>>, vector<1x128xf32>
    %84 = vector.broadcast %83 : vector<1x128xf32> to vector<8x128xf32>
    %85 = arith.addf %82, %84 : vector<8x128xf32>
    %cst_60 = arith.constant 0.000000e+00 : f32
    %86 = vector.broadcast %cst_60 : f32 to vector<8x128xf32>
    %87 = arith.maximumf %85, %86 : vector<8x128xf32>
    %88 = tpu.iota {dimensions = array<i32: 1>} : vector<8x128xi32>
    %89 = arith.addf %87, %39 : vector<8x128xf32>
    %c64_i32 = arith.constant 64 : i32
    %90 = vector.broadcast %c64_i32 : i32 to vector<8x128xi32>
    %91 = arith.cmpi sge, %88, %90 : vector<8x128xi32>
    %cst_61 = arith.constant 0.000000e+00 : f32
    %92 = vector.broadcast %cst_61 : f32 to vector<8x128xf32>
    %93 = arith.select %91, %46, %92 : vector<8x128xi1>, vector<8x128xf32>
    %94 = arith.addf %89, %93 : vector<8x128xf32>
    %95 = arith.truncf %94 : vector<8x128xf32> to vector<8x128xbf16>
    %c0_62 = arith.constant 0 : index
    %c0_63 = arith.constant 0 : index
    %96 = vector.load %arg4[%c0_62, %c0_63] : memref<8x128xbf16, #tpu.memory_space<vmem>>, vector<8x128xbf16>
    tpu.vector_store %arg4[%c0_62, %c0_63], %95 {strides = array<i32>} : memref<8x128xbf16, #tpu.memory_space<vmem>>, vector<8x128xbf16>,
    return
  }
  func.func @transform_0(%arg0: i32) -> (i32, i32) {
    %c0_i32 = arith.constant 0 : i32
    %c0_i32_0 = arith.constant 0 : i32
    return %arg0, %c0_i32 : i32, i32
  }
  func.func @transform_1(%arg0: i32) -> (i32, i32, i32) {
    %c0_i32 = arith.constant 0 : i32
    %c0_i32_0 = arith.constant 0 : i32
    %c0_i32_1 = arith.constant 0 : i32
    %c0_i32_2 = arith.constant 0 : i32
    return %c0_i32, %c0_i32_0, %c0_i32_1 : i32, i32, i32
  }
  func.func @transform_2(%arg0: i32) -> (i32, i32) {
    %c0_i32 = arith.constant 0 : i32
    %c0_i32_0 = arith.constant 0 : i32
    %c0_i32_1 = arith.constant 0 : i32
    return %c0_i32, %c0_i32_0 : i32, i32
  }
  func.func @transform_3(%arg0: i32) -> (i32, i32) {
    %c0_i32 = arith.constant 0 : i32
    %c0_i32_0 = arith.constant 0 : i32
    return %arg0, %c0_i32 : i32, i32
  }
}

</mosaic_0001>

<llo_original>
// kernel: inner_autoencoder_forward.1
$region0: #{inner_autoencoder_forward.1}
  #allocation0 [shape = 'u32[]', space=smem, size = 0x4, offset = 0x4, fixed_abs, tag = 'smem constant byte address 0x4 - core index']
  #allocation1 [shape = 'u32[72,128]{1,0:T(1,128)}', space=vmem, size = 0x9000, scoped, tag = 'internal scratch']
  #allocation2 [shape = 'f32[8,128]{1,0:T(8,128)}', space=vmem, size = 0x1000, scoped, tag = 'scratch operand']
  %s0 = inlined_call_operand.vmem [shape: bf16[8,18], index: 0, kind: input, shape index: {}]
  %s1 = inlined_call_operand.hbm [shape: bf16[9,128,128], index: 1, kind: input, shape index: {}]
  %s2 = inlined_call_operand.vmem [shape: f32[9,128], index: 2, kind: input, shape index: {}]
  %s3 = inlined_call_operand.vmem [shape: bf16[8,128], index: 3, kind: output, shape index: {}]
  %s4 = sld [smem:[#allocation0]]
  $region26: #{inner_autoencoder_forward.1} parent=0
    _
  %s6 = ssub.s32 1, %s4
  %s7 = scalar_select 0, %s6, %s4
  $region1: #{inner_autoencoder_forward.1} parent=0
    #allocation3 [shape = 'u8[294912]{0}', space=vmem, size = 0x48000, scoped, tag = 'input window, operand 1, single buffered']
    #allocation4 [shape = 's32[1]{0}', space=sflag, size = 0x4, scoped, tag = 'scoped memory for inner_autoencoder_forward.1']
    %8 = vsyncpa [#allocation4], 0
    // Predicated region
    $region2: #{inner_autoencoder_forward.1} parent=1 // pred_check
      _
    $region3: #{inner_autoencoder_forward.1} parent=1 // pred_check_branch
      %10 = sbr.rel (0) target = $region5
    $region4: #{inner_autoencoder_forward.1} parent=1 // pred_region
      _
    $region5: #{inner_autoencoder_forward.1} parent=1 // pred_fallthru
      _
    // Predicated region
    $region6: #{inner_autoencoder_forward.1} parent=1 // pred_check
      _
    $region7: #{inner_autoencoder_forward.1} parent=1 // pred_check_branch
      %12 = sbr.rel (0) target = $region9
    $region8: #{inner_autoencoder_forward.1} parent=1 // pred_region
      %14 = vsyncadd [#allocation4], 0
      %s15 = sshll.u32 %s1, 4
      %s16 = int_to_ptr.hbm [resolvable:$true] %s15
      %s17 = sshll.u32 [#allocation3], 4
      %s18 = int_to_ptr.vmem [resolvable:$true] %s17
      %23 = dma.hbm_to_vmem [thread:$0]  %s16, 9216, %s18, [#allocation4], 64, 64, 4
    $region9: #{inner_autoencoder_forward.1} parent=1 // pred_fallthru
      _
    // Predicated region
    $region10: #{inner_autoencoder_forward.1} parent=1 // pred_check
      _
    $region11: #{inner_autoencoder_forward.1} parent=1 // pred_check_branch
      %25 = sbr.rel (0) target = $region13
    $region12: #{inner_autoencoder_forward.1} parent=1 // pred_region
      _
    $region13: #{inner_autoencoder_forward.1} parent=1 // pred_fallthru
      _
    // Predicated region
    $region14: #{inner_autoencoder_forward.1} parent=1 // pred_check
      _
    $region15: #{inner_autoencoder_forward.1} parent=1 // pred_check_branch
      %27 = sbr.rel (0) target = $region17
    $region16: #{inner_autoencoder_forward.1} parent=1 // pred_region
      %29 = dma.done [#allocation4], 9216
    $region17: #{inner_autoencoder_forward.1} parent=1 // pred_fallthru
      _
    %30 = vst [vmem:[#allocation2] sm:$0xff] 0.0
    %v31 = vld [vmem:[%s0] sm:$0xf]
    %v32 = vunpack.c.l.bf16 %v31
    %vm33 = vcmask 146432
    %34 = vst.msk [vmem:[#allocation2] sm:$0xff] %vm33, %v32
    %v35 = vld [vmem:[#allocation2] sm:$0xff]
    %v36 = vld [vmem:[#allocation3] sm:$0xf]
    %v37 = vld [vmem:[#allocation3 + $0x4] sm:$0xf]
    %v38 = vld [vmem:[#allocation3 + $0x8] sm:$0xf]
    %v39 = vld [vmem:[#allocation3 + $0xc] sm:$0xf]
    %v40 = vld [vmem:[#allocation3 + $0x10] sm:$0xf]
    %v41 = vld [vmem:[#allocation3 + $0x14] sm:$0xf]
    %v42 = vld [vmem:[#allocation3 + $0x18] sm:$0xf]
    %v43 = vld [vmem:[#allocation3 + $0x1c] sm:$0xf]
    %v44 = vld [vmem:[#allocation3 + $0x20] sm:$0xf]
    %v45 = vld [vmem:[#allocation3 + $0x24] sm:$0xf]
    %v46 = vld [vmem:[#allocation3 + $0x28] sm:$0xf]
    %v47 = vld [vmem:[#allocation3 + $0x2c] sm:$0xf]
    %v48 = vld [vmem:[#allocation3 + $0x30] sm:$0xf]
    %v49 = vld [vmem:[#allocation3 + $0x34] sm:$0xf]
    %v50 = vld [vmem:[#allocation3 + $0x38] sm:$0xf]
    %v51 = vld [vmem:[#allocation3 + $0x3c] sm:$0xf]
    %v52 = vpack.c.bf16 %v35, %v35
    %v53 = vld [vmem:[%s2] sm:$0x1]
    %v54 = vperm.slane %v53, 0
    %v71 = vunpack.c.l.b16 %v36
    %v72 = vunpack.c.l.b16 %v37
    %v73 = vunpack.c.l.b16 %v38
    %v74 = vunpack.c.l.b16 %v39
    %v75 = vunpack.c.l.b16 %v40
    %v76 = vunpack.c.l.b16 %v41
    %v77 = vunpack.c.l.b16 %v42
    %v78 = vunpack.c.l.b16 %v43
    %v79 = vunpack.c.l.b16 %v44
    %v80 = vunpack.c.l.b16 %v45
    %v81 = vunpack.c.l.b16 %v46
    %v82 = vunpack.c.l.b16 %v47
    %v83 = vunpack.c.l.b16 %v48
    %v84 = vunpack.c.l.b16 %v49
    %v85 = vunpack.c.l.b16 %v50
    %v86 = vunpack.c.l.b16 %v51
    %v87 = vpack.c.b16 %v72, %v71
    %v88 = vpack.c.b16 %v74, %v73
    %v89 = vpack.c.b16 %v76, %v75
    %v90 = vpack.c.b16 %v78, %v77
    %v91 = vpack.c.b16 %v80, %v79
    %v92 = vpack.c.b16 %v82, %v81
    %v93 = vpack.c.b16 %v84, %v83
    %v94 = vpack.c.b16 %v86, %v85
    %103 = vmatpush.bf16.msra.mxu0 %v94
    %104 = vmatpush.bf16.msra.mxu0 %v93
    %105 = vmatpush.bf16.msra.mxu0 %v92
    %106 = vmatpush.bf16.msra.mxu0 %v91
    %107 = vmatpush.bf16.msra.mxu0 %v90
    %108 = vmatpush.bf16.msra.mxu0 %v89
    %109 = vmatpush.bf16.msra.mxu0 %v88
    %110 = vmatpush.bf16.msra.mxu0 %v87
    %111 = vmatmul.bf16.gmra.mxu0 %v52
    %v112 = vpop.f32.mrf.mxu0
    %v113 = vadd.f32 %v54, %v112
    %v114 = vpop.f32.mrf.mxu0
    %115 = vdwg.mxu0
    %v116 = vmax.f32 %v113, 0.0
    %s117 = scalar_lea.vmem [#allocation3], 64
    %v118 = vld [vmem:[%s117] sm:$0xf]
    %v119 = vld [vmem:[%s117 + $0x4] sm:$0xf]
    %v120 = vld [vmem:[%s117 + $0x8] sm:$0xf]
    %v121 = vld [vmem:[%s117 + $0xc] sm:$0xf]
    %v122 = vld [vmem:[%s117 + $0x10] sm:$0xf]
    %v123 = vld [vmem:[%s117 + $0x14] sm:$0xf]
    %v124 = vld [vmem:[%s117 + $0x18] sm:$0xf]
    %v125 = vld [vmem:[%s117 + $0x1c] sm:$0xf]
    %v126 = vld [vmem:[%s117 + $0x20] sm:$0xf]
    %v127 = vld [vmem:[%s117 + $0x24] sm:$0xf]
    %v128 = vld [vmem:[%s117 + $0x28] sm:$0xf]
    %v129 = vld [vmem:[%s117 + $0x2c] sm:$0xf]
    %v130 = vld [vmem:[%s117 + $0x30] sm:$0xf]
    %v131 = vld [vmem:[%s117 + $0x34] sm:$0xf]
    %v132 = vld [vmem:[%s117 + $0x38] sm:$0xf]
    %v133 = vld [vmem:[%s117 + $0x3c] sm:$0xf]
    %v134 = vpack.c.bf16 %v116, %v116
    %v135 = vld [vmem:[%s2 + $0x1] sm:$0x1]
    %v136 = vperm.slane %v135, 0
    %v153 = vunpack.c.l.b16 %v118
    %v154 = vunpack.c.l.b16 %v119
    %v155 = vunpack.c.l.b16 %v120
    %v156 = vunpack.c.l.b16 %v121
    %v157 = vunpack.c.l.b16 %v122
    %v158 = vunpack.c.l.b16 %v123
    %v159 = vunpack.c.l.b16 %v124
    %v160 = vunpack.c.l.b16 %v125
    %v161 = vunpack.c.l.b16 %v126
    %v162 = vunpack.c.l.b16 %v127
    %v163 = vunpack.c.l.b16 %v128
    %v164 = vunpack.c.l.b16 %v129
    %v165 = vunpack.c.l.b16 %v130
    %v166 = vunpack.c.l.b16 %v131
    %v167 = vunpack.c.l.b16 %v132
    %v168 = vunpack.c.l.b16 %v133
    %v169 = vpack.c.b16 %v154, %v153
    %v170 = vpack.c.b16 %v156, %v155
    %v171 = vpack.c.b16 %v158, %v157
    %v172 = vpack.c.b16 %v160, %v159
    %v173 = vpack.c.b16 %v162, %v161
    %v174 = vpack.c.b16 %v164, %v163
    %v175 = vpack.c.b16 %v166, %v165
    %v176 = vpack.c.b16 %v168, %v167
    %185 = vmatpush.bf16.msra.mxu0 %v176
    %186 = vmatpush.bf16.msra.mxu0 %v175
    %187 = vmatpush.bf16.msra.mxu0 %v174
    %188 = vmatpush.bf16.msra.mxu0 %v173
    %189 = vmatpush.bf16.msra.mxu0 %v172
    %190 = vmatpush.bf16.msra.mxu0 %v171
    %191 = vmatpush.bf16.msra.mxu0 %v170
    %192 = vmatpush.bf16.msra.mxu0 %v169
    %193 = vmatmul.bf16.gmra.mxu0 %v134
    %v194 = vpop.f32.mrf.mxu0
    %v195 = vadd.f32 %v136, %v194
    %v196 = vpop.f32.mrf.mxu0
    %197 = vdwg.mxu0
    %v198 = vmax.f32 %v195, 0.0
    %s199 = scalar_lea.vmem [#allocation3], 128
    %v200 = vld [vmem:[%s199] sm:$0xf]
    %v201 = vld [vmem:[%s199 + $0x4] sm:$0xf]
    %v202 = vld [vmem:[%s199 + $0x8] sm:$0xf]
    %v203 = vld [vmem:[%s199 + $0xc] sm:$0xf]
    %v204 = vld [vmem:[%s199 + $0x10] sm:$0xf]
    %v205 = vld [vmem:[%s199 + $0x14] sm:$0xf]
    %v206 = vld [vmem:[%s199 + $0x18] sm:$0xf]
    %v207 = vld [vmem:[%s199 + $0x1c] sm:$0xf]
    %v208 = vld [vmem:[%s199 + $0x20] sm:$0xf]
    %v209 = vld [vmem:[%s199 + $0x24] sm:$0xf]
    %v210 = vld [vmem:[%s199 + $0x28] sm:$0xf]
    %v211 = vld [vmem:[%s199 + $0x2c] sm:$0xf]
    %v212 = vld [vmem:[%s199 + $0x30] sm:$0xf]
    %v213 = vld [vmem:[%s199 + $0x34] sm:$0xf]
    %v214 = vld [vmem:[%s199 + $0x38] sm:$0xf]
    %v215 = vld [vmem:[%s199 + $0x3c] sm:$0xf]
    %v216 = vpack.c.bf16 %v198, %v198
    %v217 = vld [vmem:[%s2 + $0x2] sm:$0x1]
    %v218 = vperm.slane %v217, 0
    %v235 = vunpack.c.l.b16 %v200
    %v236 = vunpack.c.l.b16 %v201
    %v237 = vunpack.c.l.b16 %v202
    %v238 = vunpack.c.l.b16 %v203
    %v239 = vunpack.c.l.b16 %v204
    %v240 = vunpack.c.l.b16 %v205
    %v241 = vunpack.c.l.b16 %v206
    %v242 = vunpack.c.l.b16 %v207
    %v243 = vunpack.c.l.b16 %v208
    %v244 = vunpack.c.l.b16 %v209
    %v245 = vunpack.c.l.b16 %v210
    %v246 = vunpack.c.l.b16 %v211
    %v247 = vunpack.c.l.b16 %v212
    %v248 = vunpack.c.l.b16 %v213
    %v249 = vunpack.c.l.b16 %v214
    %v250 = vunpack.c.l.b16 %v215
    %v251 = vpack.c.b16 %v236, %v235
    %v252 = vpack.c.b16 %v238, %v237
    %v253 = vpack.c.b16 %v240, %v239
    %v254 = vpack.c.b16 %v242, %v241
    %v255 = vpack.c.b16 %v244, %v243
    %v256 = vpack.c.b16 %v246, %v245
    %v257 = vpack.c.b16 %v248, %v247
    %v258 = vpack.c.b16 %v250, %v249
    %267 = vmatpush.bf16.msra.mxu0 %v258
    %268 = vmatpush.bf16.msra.mxu0 %v257
    %269 = vmatpush.bf16.msra.mxu0 %v256
    %270 = vmatpush.bf16.msra.mxu0 %v255
    %271 = vmatpush.bf16.msra.mxu0 %v254
    %272 = vmatpush.bf16.msra.mxu0 %v253
    %273 = vmatpush.bf16.msra.mxu0 %v252
    %274 = vmatpush.bf16.msra.mxu0 %v251
    %275 = vmatmul.bf16.gmra.mxu0 %v216
    %v276 = vpop.f32.mrf.mxu0
    %v277 = vadd.f32 %v218, %v276
    %v278 = vpop.f32.mrf.mxu0
    %279 = vdwg.mxu0
    %v280 = vmax.f32 %v277, 0.0
    %s281 = scalar_lea.vmem [#allocation3], 192
    %v282 = vld [vmem:[%s281] sm:$0xf]
    %v283 = vld [vmem:[%s281 + $0x4] sm:$0xf]
    %v284 = vld [vmem:[%s281 + $0x8] sm:$0xf]
    %v285 = vld [vmem:[%s281 + $0xc] sm:$0xf]
    %v286 = vld [vmem:[%s281 + $0x10] sm:$0xf]
    %v287 = vld [vmem:[%s281 + $0x14] sm:$0xf]
    %v288 = vld [vmem:[%s281 + $0x18] sm:$0xf]
    %v289 = vld [vmem:[%s281 + $0x1c] sm:$0xf]
    %v290 = vld [vmem:[%s281 + $0x20] sm:$0xf]
    %v291 = vld [vmem:[%s281 + $0x24] sm:$0xf]
    %v292 = vld [vmem:[%s281 + $0x28] sm:$0xf]
    %v293 = vld [vmem:[%s281 + $0x2c] sm:$0xf]
    %v294 = vld [vmem:[%s281 + $0x30] sm:$0xf]
    %v295 = vld [vmem:[%s281 + $0x34] sm:$0xf]
    %v296 = vld [vmem:[%s281 + $0x38] sm:$0xf]
    %v297 = vld [vmem:[%s281 + $0x3c] sm:$0xf]
    %v298 = vpack.c.bf16 %v280, %v280
    %v299 = vld [vmem:[%s2 + $0x3] sm:$0x1]
    %v300 = vperm.slane %v299, 0
    %v317 = vunpack.c.l.b16 %v282
    %v318 = vunpack.c.l.b16 %v283
    %v319 = vunpack.c.l.b16 %v284
    %v320 = vunpack.c.l.b16 %v285
    %v321 = vunpack.c.l.b16 %v286
    %v322 = vunpack.c.l.b16 %v287
    %v323 = vunpack.c.l.b16 %v288
    %v324 = vunpack.c.l.b16 %v289
    %v325 = vunpack.c.l.b16 %v290
    %v326 = vunpack.c.l.b16 %v291
    %v327 = vunpack.c.l.b16 %v292
    %v328 = vunpack.c.l.b16 %v293
    %v329 = vunpack.c.l.b16 %v294
    %v330 = vunpack.c.l.b16 %v295
    %v331 = vunpack.c.l.b16 %v296
    %v332 = vunpack.c.l.b16 %v297
    %v333 = vpack.c.b16 %v318, %v317
    %v334 = vpack.c.b16 %v320, %v319
    %v335 = vpack.c.b16 %v322, %v321
    %v336 = vpack.c.b16 %v324, %v323
    %v337 = vpack.c.b16 %v326, %v325
    %v338 = vpack.c.b16 %v328, %v327
    %v339 = vpack.c.b16 %v330, %v329
    %v340 = vpack.c.b16 %v332, %v331
    %349 = vmatpush.bf16.msra.mxu0 %v340
    %350 = vmatpush.bf16.msra.mxu0 %v339
    %351 = vmatpush.bf16.msra.mxu0 %v338
    %352 = vmatpush.bf16.msra.mxu0 %v337
    %353 = vmatpush.bf16.msra.mxu0 %v336
    %354 = vmatpush.bf16.msra.mxu0 %v335
    %355 = vmatpush.bf16.msra.mxu0 %v334
    %356 = vmatpush.bf16.msra.mxu0 %v333
    %357 = vmatmul.bf16.gmra.mxu0 %v298
    %v358 = vpop.f32.mrf.mxu0
    %v359 = vadd.f32 %v300, %v358
    %v360 = vpop.f32.mrf.mxu0
    %361 = vdwg.mxu0
    %s362 = scalar_lea.vmem [#allocation3], 256
    %v363 = vld [vmem:[%s362] sm:$0xf]
    %v364 = vld [vmem:[%s362 + $0x4] sm:$0xf]
    %v365 = vld [vmem:[%s362 + $0x8] sm:$0xf]
    %v366 = vld [vmem:[%s362 + $0xc] sm:$0xf]
    %v367 = vld [vmem:[%s362 + $0x10] sm:$0xf]
    %v368 = vld [vmem:[%s362 + $0x14] sm:$0xf]
    %v369 = vld [vmem:[%s362 + $0x18] sm:$0xf]
    %v370 = vld [vmem:[%s362 + $0x1c] sm:$0xf]
    %v371 = vld [vmem:[%s362 + $0x20] sm:$0xf]
    %v372 = vld [vmem:[%s362 + $0x24] sm:$0xf]
    %v373 = vld [vmem:[%s362 + $0x28] sm:$0xf]
    %v374 = vld [vmem:[%s362 + $0x2c] sm:$0xf]
    %v375 = vld [vmem:[%s362 + $0x30] sm:$0xf]
    %v376 = vld [vmem:[%s362 + $0x34] sm:$0xf]
    %v377 = vld [vmem:[%s362 + $0x38] sm:$0xf]
    %v378 = vld [vmem:[%s362 + $0x3c] sm:$0xf]
    %v379 = vld [vmem:[%s2 + $0x4] sm:$0x1]
    %v380 = vperm.slane %v379, 0
    %v397 = vunpack.c.l.b16 %v363
    %v398 = vunpack.c.l.b16 %v364
    %v399 = vunpack.c.l.b16 %v365
    %v400 = vunpack.c.l.b16 %v366
    %v401 = vunpack.c.l.b16 %v367
    %v402 = vunpack.c.l.b16 %v368
    %v403 = vunpack.c.l.b16 %v369
    %v404 = vunpack.c.l.b16 %v370
    %v405 = vunpack.c.l.b16 %v371
    %v406 = vunpack.c.l.b16 %v372
    %v407 = vunpack.c.l.b16 %v373
    %v408 = vunpack.c.l.b16 %v374
    %v409 = vunpack.c.l.b16 %v375
    %v410 = vunpack.c.l.b16 %v376
    %v411 = vunpack.c.l.b16 %v377
    %v412 = vunpack.c.l.b16 %v378
    %v413 = vpack.c.b16 %v398, %v397
    %v414 = vpack.c.b16 %v400, %v399
    %v415 = vpack.c.b16 %v402, %v401
    %v416 = vpack.c.b16 %v404, %v403
    %v417 = vpack.c.b16 %v406, %v405
    %v418 = vpack.c.b16 %v408, %v407
    %v419 = vpack.c.b16 %v410, %v409
    %v420 = vpack.c.b16 %v412, %v411
    %429 = vmatpush.bf16.msra.mxu0 %v420
    %430 = vmatpush.bf16.msra.mxu0 %v419
    %431 = vmatpush.bf16.msra.mxu0 %v418
    %432 = vmatpush.bf16.msra.mxu0 %v417
    %433 = vmatpush.bf16.msra.mxu0 %v416
    %434 = vmatpush.bf16.msra.mxu0 %v415
    %435 = vmatpush.bf16.msra.mxu0 %v414
    %436 = vmatpush.bf16.msra.mxu0 %v413
    %437 = vmatmul.bf16.gmra.mxu0 %v298
    %v438 = vpop.f32.mrf.mxu0
    %v439 = vadd.f32 %v380, %v438
    %v440 = vpop.f32.mrf.mxu0
    %441 = vdwg.mxu0
    %v442 = vmul.f32 %v439, 0.5
    %v443 = vmul.f32 %v442, 1.442695
    %v444 = vpow.pop %v443
    %v445 = vmul.f32 %v444, %v35
    %v446 = vadd.f32 %v359, %v445
    %s447 = scalar_lea.vmem [#allocation3], 320
    %v448 = vld [vmem:[%s447] sm:$0xf]
    %v449 = vld [vmem:[%s447 + $0x4] sm:$0xf]
    %v450 = vld [vmem:[%s447 + $0x8] sm:$0xf]
    %v451 = vld [vmem:[%s447 + $0xc] sm:$0xf]
    %v452 = vld [vmem:[%s447 + $0x10] sm:$0xf]
    %v453 = vld [vmem:[%s447 + $0x14] sm:$0xf]
    %v454 = vld [vmem:[%s447 + $0x18] sm:$0xf]
    %v455 = vld [vmem:[%s447 + $0x1c] sm:$0xf]
    %v456 = vld [vmem:[%s447 + $0x20] sm:$0xf]
    %v457 = vld [vmem:[%s447 + $0x24] sm:$0xf]
    %v458 = vld [vmem:[%s447 + $0x28] sm:$0xf]
    %v459 = vld [vmem:[%s447 + $0x2c] sm:$0xf]
    %v460 = vld [vmem:[%s447 + $0x30] sm:$0xf]
    %v461 = vld [vmem:[%s447 + $0x34] sm:$0xf]
    %v462 = vld [vmem:[%s447 + $0x38] sm:$0xf]
    %v463 = vld [vmem:[%s447 + $0x3c] sm:$0xf]
    %v464 = vpack.c.bf16 %v446, %v446
    %v465 = vld [vmem:[%s2 + $0x5] sm:$0x1]
    %v466 = vperm.slane %v465, 0
    %v483 = vunpack.c.l.b16 %v448
    %v484 = vunpack.c.l.b16 %v449
    %v485 = vunpack.c.l.b16 %v450
    %v486 = vunpack.c.l.b16 %v451
    %v487 = vunpack.c.l.b16 %v452
    %v488 = vunpack.c.l.b16 %v453
    %v489 = vunpack.c.l.b16 %v454
    %v490 = vunpack.c.l.b16 %v455
    %v491 = vunpack.c.l.b16 %v456
    %v492 = vunpack.c.l.b16 %v457
    %v493 = vunpack.c.l.b16 %v458
    %v494 = vunpack.c.l.b16 %v459
    %v495 = vunpack.c.l.b16 %v460
    %v496 = vunpack.c.l.b16 %v461
    %v497 = vunpack.c.l.b16 %v462
    %v498 = vunpack.c.l.b16 %v463
    %v499 = vpack.c.b16 %v484, %v483
    %v500 = vpack.c.b16 %v486, %v485
    %v501 = vpack.c.b16 %v488, %v487
    %v502 = vpack.c.b16 %v490, %v489
    %v503 = vpack.c.b16 %v492, %v491
    %v504 = vpack.c.b16 %v494, %v493
    %v505 = vpack.c.b16 %v496, %v495
    %v506 = vpack.c.b16 %v498, %v497
    %515 = vmatpush.bf16.msra.mxu0 %v506
    %516 = vmatpush.bf16.msra.mxu0 %v505
    %517 = vmatpush.bf16.msra.mxu0 %v504
    %518 = vmatpush.bf16.msra.mxu0 %v503
    %519 = vmatpush.bf16.msra.mxu0 %v502
    %520 = vmatpush.bf16.msra.mxu0 %v501
    %521 = vmatpush.bf16.msra.mxu0 %v500
    %522 = vmatpush.bf16.msra.mxu0 %v499
    %523 = vmatmul.bf16.gmra.mxu0 %v464
    %v524 = vpop.f32.mrf.mxu0
    %v525 = vadd.f32 %v466, %v524
    %v526 = vpop.f32.mrf.mxu0
    %527 = vdwg.mxu0
    %v528 = vmax.f32 %v525, 0.0
    %s529 = scalar_lea.vmem [#allocation3], 384
    %v530 = vld [vmem:[%s529] sm:$0xf]
    %v531 = vld [vmem:[%s529 + $0x4] sm:$0xf]
    %v532 = vld [vmem:[%s529 + $0x8] sm:$0xf]
    %v533 = vld [vmem:[%s529 + $0xc] sm:$0xf]
    %v534 = vld [vmem:[%s529 + $0x10] sm:$0xf]
    %v535 = vld [vmem:[%s529 + $0x14] sm:$0xf]
    %v536 = vld [vmem:[%s529 + $0x18] sm:$0xf]
    %v537 = vld [vmem:[%s529 + $0x1c] sm:$0xf]
    %v538 = vld [vmem:[%s529 + $0x20] sm:$0xf]
    %v539 = vld [vmem:[%s529 + $0x24] sm:$0xf]
    %v540 = vld [vmem:[%s529 + $0x28] sm:$0xf]
    %v541 = vld [vmem:[%s529 + $0x2c] sm:$0xf]
    %v542 = vld [vmem:[%s529 + $0x30] sm:$0xf]
    %v543 = vld [vmem:[%s529 + $0x34] sm:$0xf]
    %v544 = vld [vmem:[%s529 + $0x38] sm:$0xf]
    %v545 = vld [vmem:[%s529 + $0x3c] sm:$0xf]
    %v546 = vpack.c.bf16 %v528, %v528
    %v547 = vld [vmem:[%s2 + $0x6] sm:$0x1]
    %v548 = vperm.slane %v547, 0
    %v565 = vunpack.c.l.b16 %v530
    %v566 = vunpack.c.l.b16 %v531
    %v567 = vunpack.c.l.b16 %v532
    %v568 = vunpack.c.l.b16 %v533
    %v569 = vunpack.c.l.b16 %v534
    %v570 = vunpack.c.l.b16 %v535
    %v571 = vunpack.c.l.b16 %v536
    %v572 = vunpack.c.l.b16 %v537
    %v573 = vunpack.c.l.b16 %v538
    %v574 = vunpack.c.l.b16 %v539
    %v575 = vunpack.c.l.b16 %v540
    %v576 = vunpack.c.l.b16 %v541
    %v577 = vunpack.c.l.b16 %v542
    %v578 = vunpack.c.l.b16 %v543
    %v579 = vunpack.c.l.b16 %v544
    %v580 = vunpack.c.l.b16 %v545
    %v581 = vpack.c.b16 %v566, %v565
    %v582 = vpack.c.b16 %v568, %v567
    %v583 = vpack.c.b16 %v570, %v569
    %v584 = vpack.c.b16 %v572, %v571
    %v585 = vpack.c.b16 %v574, %v573
    %v586 = vpack.c.b16 %v576, %v575
    %v587 = vpack.c.b16 %v578, %v577
    %v588 = vpack.c.b16 %v580, %v579
    %597 = vmatpush.bf16.msra.mxu0 %v588
    %598 = vmatpush.bf16.msra.mxu0 %v587
    %599 = vmatpush.bf16.msra.mxu0 %v586
    %600 = vmatpush.bf16.msra.mxu0 %v585
    %601 = vmatpush.bf16.msra.mxu0 %v584
    %602 = vmatpush.bf16.msra.mxu0 %v583
    %603 = vmatpush.bf16.msra.mxu0 %v582
    %604 = vmatpush.bf16.msra.mxu0 %v581
    %605 = vmatmul.bf16.gmra.mxu0 %v546
    %v606 = vpop.f32.mrf.mxu0
    %v607 = vadd.f32 %v548, %v606
    %v608 = vpop.f32.mrf.mxu0
    %609 = vdwg.mxu0
    %v610 = vmax.f32 %v607, 0.0
    %s611 = scalar_lea.vmem [#allocation3], 448
    %v612 = vld [vmem:[%s611] sm:$0xf]
    %v613 = vld [vmem:[%s611 + $0x4] sm:$0xf]
    %v614 = vld [vmem:[%s611 + $0x8] sm:$0xf]
    %v615 = vld [vmem:[%s611 + $0xc] sm:$0xf]
    %v616 = vld [vmem:[%s611 + $0x10] sm:$0xf]
    %v617 = vld [vmem:[%s611 + $0x14] sm:$0xf]
    %v618 = vld [vmem:[%s611 + $0x18] sm:$0xf]
    %v619 = vld [vmem:[%s611 + $0x1c] sm:$0xf]
    %v620 = vld [vmem:[%s611 + $0x20] sm:$0xf]
    %v621 = vld [vmem:[%s611 + $0x24] sm:$0xf]
    %v622 = vld [vmem:[%s611 + $0x28] sm:$0xf]
    %v623 = vld [vmem:[%s611 + $0x2c] sm:$0xf]
    %v624 = vld [vmem:[%s611 + $0x30] sm:$0xf]
    %v625 = vld [vmem:[%s611 + $0x34] sm:$0xf]
    %v626 = vld [vmem:[%s611 + $0x38] sm:$0xf]
    %v627 = vld [vmem:[%s611 + $0x3c] sm:$0xf]
    %v628 = vpack.c.bf16 %v610, %v610
    %v629 = vld [vmem:[%s2 + $0x7] sm:$0x1]
    %v630 = vperm.slane %v629, 0
    %v647 = vunpack.c.l.b16 %v612
    %v648 = vunpack.c.l.b16 %v613
    %v649 = vunpack.c.l.b16 %v614
    %v650 = vunpack.c.l.b16 %v615
    %v651 = vunpack.c.l.b16 %v616
    %v652 = vunpack.c.l.b16 %v617
    %v653 = vunpack.c.l.b16 %v618
    %v654 = vunpack.c.l.b16 %v619
    %v655 = vunpack.c.l.b16 %v620
    %v656 = vunpack.c.l.b16 %v621
    %v657 = vunpack.c.l.b16 %v622
    %v658 = vunpack.c.l.b16 %v623
    %v659 = vunpack.c.l.b16 %v624
    %v660 = vunpack.c.l.b16 %v625
    %v661 = vunpack.c.l.b16 %v626
    %v662 = vunpack.c.l.b16 %v627
    %v663 = vpack.c.b16 %v648, %v647
    %v664 = vpack.c.b16 %v650, %v649
    %v665 = vpack.c.b16 %v652, %v651
    %v666 = vpack.c.b16 %v654, %v653
    %v667 = vpack.c.b16 %v656, %v655
    %v668 = vpack.c.b16 %v658, %v657
    %v669 = vpack.c.b16 %v660, %v659
    %v670 = vpack.c.b16 %v662, %v661
    %679 = vmatpush.bf16.msra.mxu0 %v670
    %680 = vmatpush.bf16.msra.mxu0 %v669
    %681 = vmatpush.bf16.msra.mxu0 %v668
    %682 = vmatpush.bf16.msra.mxu0 %v667
    %683 = vmatpush.bf16.msra.mxu0 %v666
    %684 = vmatpush.bf16.msra.mxu0 %v665
    %685 = vmatpush.bf16.msra.mxu0 %v664
    %686 = vmatpush.bf16.msra.mxu0 %v663
    %687 = vmatmul.bf16.gmra.mxu0 %v628
    %v688 = vpop.f32.mrf.mxu0
    %v689 = vadd.f32 %v630, %v688
    %v690 = vpop.f32.mrf.mxu0
    %691 = vdwg.mxu0
    %v692 = vmax.f32 %v689, 0.0
    %s693 = scalar_lea.vmem [#allocation3], 512
    %v694 = vld [vmem:[%s693] sm:$0xf]
    %v695 = vld [vmem:[%s693 + $0x4] sm:$0xf]
    %v696 = vld [vmem:[%s693 + $0x8] sm:$0xf]
    %v697 = vld [vmem:[%s693 + $0xc] sm:$0xf]
    %v698 = vld [vmem:[%s693 + $0x10] sm:$0xf]
    %v699 = vld [vmem:[%s693 + $0x14] sm:$0xf]
    %v700 = vld [vmem:[%s693 + $0x18] sm:$0xf]
    %v701 = vld [vmem:[%s693 + $0x1c] sm:$0xf]
    %v702 = vld [vmem:[%s693 + $0x20] sm:$0xf]
    %v703 = vld [vmem:[%s693 + $0x24] sm:$0xf]
    %v704 = vld [vmem:[%s693 + $0x28] sm:$0xf]
    %v705 = vld [vmem:[%s693 + $0x2c] sm:$0xf]
    %v706 = vld [vmem:[%s693 + $0x30] sm:$0xf]
    %v707 = vld [vmem:[%s693 + $0x34] sm:$0xf]
    %v708 = vld [vmem:[%s693 + $0x38] sm:$0xf]
    %v709 = vld [vmem:[%s693 + $0x3c] sm:$0xf]
    %v710 = vpack.c.bf16 %v692, %v692
    %v711 = vld [vmem:[%s2 + $0x8] sm:$0x1]
    %v712 = vperm.slane %v711, 0
    %v729 = vunpack.c.l.b16 %v694
    %v730 = vunpack.c.l.b16 %v695
    %v731 = vunpack.c.l.b16 %v696
    %v732 = vunpack.c.l.b16 %v697
    %v733 = vunpack.c.l.b16 %v698
    %v734 = vunpack.c.l.b16 %v699
    %v735 = vunpack.c.l.b16 %v700
    %v736 = vunpack.c.l.b16 %v701
    %v737 = vunpack.c.l.b16 %v702
    %v738 = vunpack.c.l.b16 %v703
    %v739 = vunpack.c.l.b16 %v704
    %v740 = vunpack.c.l.b16 %v705
    %v741 = vunpack.c.l.b16 %v706
    %v742 = vunpack.c.l.b16 %v707
    %v743 = vunpack.c.l.b16 %v708
    %v744 = vunpack.c.l.b16 %v709
    %v745 = vpack.c.b16 %v730, %v729
    %v746 = vpack.c.b16 %v732, %v731
    %v747 = vpack.c.b16 %v734, %v733
    %v748 = vpack.c.b16 %v736, %v735
    %v749 = vpack.c.b16 %v738, %v737
    %v750 = vpack.c.b16 %v740, %v739
    %v751 = vpack.c.b16 %v742, %v741
    %v752 = vpack.c.b16 %v744, %v743
    %761 = vmatpush.bf16.msra.mxu0 %v752
    %762 = vmatpush.bf16.msra.mxu0 %v751
    %763 = vmatpush.bf16.msra.mxu0 %v750
    %764 = vmatpush.bf16.msra.mxu0 %v749
    %765 = vmatpush.bf16.msra.mxu0 %v748
    %766 = vmatpush.bf16.msra.mxu0 %v747
    %767 = vmatpush.bf16.msra.mxu0 %v746
    %768 = vmatpush.bf16.msra.mxu0 %v745
    %769 = vmatmul.bf16.gmra.mxu0 %v710
    %v770 = vpop.f32.mrf.mxu0
    %v771 = vadd.f32 %v712, %v770
    %v772 = vpop.f32.mrf.mxu0
    %773 = vdwg.mxu0
    %v774 = vmax.f32 %v771, 0.0
    %v775 = vlaneseq
    %v776 = vand.u32 %v775, 127
    %v777 = vadd.f32 %v774, %v359
    %vm778 = vcmp.ge.s32.totalorder %v776, 64
    %v779 = vsel %vm778, %v439, 0.0
    %v780 = vadd.f32 %v777, %v779
    %v781 = vpack.c.bf16 %v780, %v780
    %782 = vst [vmem:[%s3] sm:$0xf] %v781
    // Predicated region
    $region18: #{inner_autoencoder_forward.1} parent=1 // pred_check
      _
    $region19: #{inner_autoencoder_forward.1} parent=1 // pred_check_branch
      %784 = sbr.rel (0) target = $region21
    $region20: #{inner_autoencoder_forward.1} parent=1 // pred_region
      _
    $region21: #{inner_autoencoder_forward.1} parent=1 // pred_fallthru
      _
    // Predicated region
    $region22: #{inner_autoencoder_forward.1} parent=1 // pred_check
      _
    $region23: #{inner_autoencoder_forward.1} parent=1 // pred_check_branch
      %786 = sbr.rel (0) target = $region25
    $region24: #{inner_autoencoder_forward.1} parent=1 // pred_region
      _
    $region25: #{inner_autoencoder_forward.1} parent=1 // pred_fallthru
      _
    %787 = vsyncpa [#allocation4], 1

</llo_original>
